<compile_context>
chip_gen: v7x
topology: tpu7x:2x2x1
jax: 0.10.0
libtpu: 0.0.40
codegen_flags: <defaults>
</compile_context>

<pallas_src>
import jax
import jax.numpy as jnp
from jax.experimental import pallas as pl
from jax.experimental.pallas import tpu as pltpu

# ---- packed-slab layout (row offsets; every block starts at lane 0 and on an
# ---- 8-row band so in-kernel static slices stay tile-friendly) --------------
_R_W2, _R_W3A, _R_W3B = 0, 16, 32
_R_W4A, _R_W4B, _R_W4C = 40, 56, 64
_R_GA, _R_GB, _R_BIAS = 72, 80, 88
_SLAB_SHAPE = (96, 16)


def symreg_kernel(x_ref, w1_ref, slab_ref, o_ref):
    f32 = jnp.float32
    x = x_ref[...]                                            # (N, 512)

    # --- unpack the parameter slab (static slices) ---------------------------
    w2 = slab_ref[_R_W2:_R_W2 + 10, 0:7]                      # (10, 7)
    w3a = slab_ref[_R_W3A:_R_W3A + 10, 0:7]                   # (10, 7) fc3 rows for h1
    w3b = slab_ref[_R_W3B:_R_W3B + 7, 0:7]                    # (7, 7)  fc3 rows for sym1 (2 zero rows)
    w4a = slab_ref[_R_W4A:_R_W4A + 10, 0:1]                   # (10, 1) fc4 rows for h1
    w4b = slab_ref[_R_W4B:_R_W4B + 7, 0:1]                    # (7, 1)  fc4 rows for sym1
    w4c = slab_ref[_R_W4C:_R_W4C + 7, 0:1]                    # (7, 1)  fc4 rows for sym2
    ga = slab_ref[_R_GA:_R_GA + 7, 0:7]                       # (7, 7) 0/1 gather: "left" operand
    gb = slab_ref[_R_GB:_R_GB + 7, 0:7]                       # (7, 7) 0/1 gather: "right" operand
    b1 = slab_ref[_R_BIAS + 0:_R_BIAS + 1, 0:10]              # (1, 10)
    b2 = slab_ref[_R_BIAS + 1:_R_BIAS + 2, 0:7]               # (1, 7)
    b3 = slab_ref[_R_BIAS + 2:_R_BIAS + 3, 0:7]               # (1, 7)
    b4 = slab_ref[_R_BIAS + 3:_R_BIAS + 4, 0:1]               # (1, 1)

    h1 = jnp.maximum(jnp.dot(x, w1_ref[...], preferred_element_type=f32) + b1, 0.0)   # (N, 10)
    h2 = jnp.maximum(jnp.dot(h1, w2, preferred_element_type=f32) + b2, 0.0)           # (N, 7)

    lane = jax.lax.broadcasted_iota(jnp.int32, h2.shape, 1)                            # (N, 7)

    def sym_features(h):
        # Full-width form of [h0**3, sin(h1), tanh(h2), h3*h4, h5/(h6+1e-8), 0, 0].
        # `left`/`right` hold, per output lane, the operand(s) each feature needs,
        # gathered with tiny exact 0/1 matmuls instead of 1-lane slices.
        left = jnp.dot(h, ga, preferred_element_type=f32)     # [h0, h1, h2, h3, h5, 0, 0]
        right = jnp.dot(h, gb, preferred_element_type=f32)    # [ 0,  0,  0, h4, h6, 0, 0]
        cube = left * left * left
        sine = jnp.sin(left)
        tanh = jnp.tanh(left)
        prod = left * right
        ratio = left * pl.reciprocal(right + 1e-8, approx=False)   # exact reciprocal (EUP)
        return jnp.where(lane == 0, cube,
               jnp.where(lane == 1, sine,
               jnp.where(lane == 2, tanh,
               jnp.where(lane == 3, prod,
               jnp.where(lane == 4, ratio, 0.0)))))            # (N, 7); lanes 5,6 == 0

    s1 = sym_features(h2)                                                               # (N, 7)
    h3 = jnp.maximum(jnp.dot(h1, w3a, preferred_element_type=f32)
                     + jnp.dot(s1, w3b, preferred_element_type=f32) + b3, 0.0)          # (N, 7)
    s2 = sym_features(h3)                                                               # (N, 7)

    out = (jnp.dot(h1, w4a, preferred_element_type=f32)
           + jnp.dot(s1, w4b, preferred_element_type=f32)
           + jnp.dot(s2, w4c, preferred_element_type=f32) + b4)                         # (N, 1)
    o_ref[...] = out


def init_params(key):
    # Deterministic PyTorch-style uniform(-1/sqrt(fan_in), 1/sqrt(fan_in)) init.
    def linear(k, fan_in, fan_out):
        kw, kb = jax.random.split(k)
        bound = 1.0 / (fan_in ** 0.5)
        w = jax.random.uniform(kw, (fan_in, fan_out), jnp.float32, -bound, bound)
        b = jax.random.uniform(kb, (1, fan_out), jnp.float32, -bound, bound)
        return w, b

    k1, k2, k3, k4 = jax.random.split(key, 4)
    w1, b1 = linear(k1, 512, 10)
    w2, b2 = linear(k2, 10, 7)
    w3, b3 = linear(k3, 15, 7)
    w4, b4 = linear(k4, 20, 1)
    return (w1, b1, w2, b2, w3, b3, w4, b4)


def pack_params(params):
    """One-time packing: fc1 weight stays standalone; everything else goes into
    a single zero-padded (96, 16) slab (biases, w2, split w3/w4, gather mats)."""
    w1, b1, w2, b2, w3, b3, w4, b4 = params

    # 0/1 gather matrices for the symbolic-feature block.
    ga = jnp.zeros((7, 7), jnp.float32)
    ga = (ga.at[0, 0].set(1.0).at[1, 1].set(1.0).at[2, 2].set(1.0)
            .at[3, 3].set(1.0).at[5, 4].set(1.0))              # left  = [h0,h1,h2,h3,h5,0,0]
    gb = jnp.zeros((7, 7), jnp.float32).at[4, 3].set(1.0).at[6, 4].set(1.0)  # right = [0,0,0,h4,h6,0,0]

    slab = jnp.zeros(_SLAB_SHAPE, jnp.float32)
    slab = slab.at[_R_W2:_R_W2 + 10, 0:7].set(w2)
    slab = slab.at[_R_W3A:_R_W3A + 10, 0:7].set(w3[0:10, :])
    slab = slab.at[_R_W3B:_R_W3B + 5, 0:7].set(w3[10:15, :])   # rows 5,6 of block stay 0
    slab = slab.at[_R_W4A:_R_W4A + 10, 0:1].set(w4[0:10, :])
    slab = slab.at[_R_W4B:_R_W4B + 5, 0:1].set(w4[10:15, :])
    slab = slab.at[_R_W4C:_R_W4C + 5, 0:1].set(w4[15:20, :])
    slab = slab.at[_R_GA:_R_GA + 7, 0:7].set(ga)
    slab = slab.at[_R_GB:_R_GB + 7, 0:7].set(gb)
    slab = slab.at[_R_BIAS + 0, 0:10].set(b1[0])
    slab = slab.at[_R_BIAS + 1, 0:7].set(b2[0])
    slab = slab.at[_R_BIAS + 2, 0:7].set(b3[0])
    slab = slab.at[_R_BIAS + 3, 0:1].set(b4[0])
    return w1, slab


def symbolic_regression_forward(x, w1, slab):
    n = x.size // 512
    x2d = x.reshape(n, 512).astype(jnp.float32)                # glue: torch view(-1, 512)
    vmem = pl.BlockSpec(memory_space=pltpu.MemorySpace.VMEM)
    # Note: single grid point is correct for tiny N (whole problem < 100 KB of
    # VMEM).  If batch N ever grows to hundreds+, tile the row dim over a
    # grid (rows a multiple of 8/128) with dimension_semantics=("parallel",)
    # and a lane-dense output slab to use both TensorCores on v7x.
    return pl.pallas_call(
        symreg_kernel,
        out_shape=jax.ShapeDtypeStruct((n, 1), jnp.float32),
        in_specs=[vmem, vmem, vmem],
        out_specs=vmem,
    )(x2d, w1, slab)


def _reference_forward(x, params):
    # Pure-JAX mirror of the PyTorch module (concat/stack form), for assertion.
    w1, b1, w2, b2, w3, b3, w4, b4 = params
    n = x.size // 512
    h = x.reshape(n, 512).astype(jnp.float32)
    h1 = jnp.maximum(h @ w1 + b1, 0.0)
    residual = h1
    h2 = jnp.maximum(h1 @ w2 + b2, 0.0)
    s1 = jnp.stack([h2[:, 0] ** 3, jnp.sin(h2[:, 1]), jnp.tanh(h2[:, 2]),
                    h2[:, 3] * h2[:, 4], h2[:, 5] / (h2[:, 6] + 1e-8)], axis=1)
    residual = jnp.concatenate([residual, s1], axis=1)
    h3 = jnp.maximum(residual @ w3 + b3, 0.0)
    s2 = jnp.stack([h3[:, 0] ** 3, jnp.sin(h3[:, 1]), jnp.tanh(h3[:, 2]),
                    h3[:, 3] * h3[:, 4], h3[:, 5] / (h3[:, 6] + 1e-8)], axis=1)
    feat = jnp.concatenate([residual, s2], axis=1)
    return feat @ w4 + b4


if __name__ == "__main__":
    key = jax.random.PRNGKey(0)
    kx, kp = jax.random.split(key)
    x = jax.random.normal(kx, (2, 4, 16, 16), dtype=jnp.float32)  # NCHW, 2*4*16*16 = 4*512
    params = init_params(kp)
    w1, slab = pack_params(params)

    out = symbolic_regression_forward(x, w1, slab)
    out = jax.block_until_ready(out)

    ref = jax.block_until_ready(_reference_forward(x, params))
    assert out.shape == (4, 1), out.shape
    # rtol slightly relaxed: the kernel splits the fc3/fc4 contractions and uses
    # reciprocal*mul, which reorders fp ops relative to the reference while
    # staying mathematically identical.
    assert jnp.allclose(out, ref, rtol=1e-4, atol=1e-6), "mismatch vs JAX reference"

    print("KERNEL_OK")
</pallas_src>

<mosaic_0001>
module attributes {stable_mosaic.version = 11 : i64} {
  func.func @symreg_kernel(%arg0: memref<4x512xf32, #tpu.memory_space<vmem>>, %arg1: memref<512x10xf32, #tpu.memory_space<vmem>>, %arg2: memref<96x16xf32, #tpu.memory_space<vmem>>, %arg3: memref<4x1xf32, #tpu.memory_space<vmem>>) attributes {dimension_semantics = [], scalar_prefetch = 0 : i64, scratch_operands = 0 : i64, tpu.core_type = #tpu.core_type<tc>} {
    %c0 = arith.constant 0 : index
    %c0_0 = arith.constant 0 : index
    %0 = vector.load %arg0[%c0, %c0_0] : memref<4x512xf32, #tpu.memory_space<vmem>>, vector<4x512xf32>
    %c0_1 = arith.constant 0 : index
    %c0_2 = arith.constant 0 : index
    %1 = vector.load %arg2[%c0_1, %c0_2] : memref<96x16xf32, #tpu.memory_space<vmem>>, vector<10x7xf32>
    %c16 = arith.constant 16 : index
    %c0_3 = arith.constant 0 : index
    %2 = vector.load %arg2[%c16, %c0_3] : memref<96x16xf32, #tpu.memory_space<vmem>>, vector<10x7xf32>
    %c32 = arith.constant 32 : index
    %c0_4 = arith.constant 0 : index
    %3 = vector.load %arg2[%c32, %c0_4] : memref<96x16xf32, #tpu.memory_space<vmem>>, vector<7x7xf32>
    %c40 = arith.constant 40 : index
    %c0_5 = arith.constant 0 : index
    %4 = vector.load %arg2[%c40, %c0_5] : memref<96x16xf32, #tpu.memory_space<vmem>>, vector<10x1xf32>
    %c56 = arith.constant 56 : index
    %c0_6 = arith.constant 0 : index
    %5 = vector.load %arg2[%c56, %c0_6] : memref<96x16xf32, #tpu.memory_space<vmem>>, vector<7x1xf32>
    %c64 = arith.constant 64 : index
    %c0_7 = arith.constant 0 : index
    %6 = vector.load %arg2[%c64, %c0_7] : memref<96x16xf32, #tpu.memory_space<vmem>>, vector<7x1xf32>
    %c72 = arith.constant 72 : index
    %c0_8 = arith.constant 0 : index
    %7 = vector.load %arg2[%c72, %c0_8] : memref<96x16xf32, #tpu.memory_space<vmem>>, vector<7x7xf32>
    %c80 = arith.constant 80 : index
    %c0_9 = arith.constant 0 : index
    %8 = vector.load %arg2[%c80, %c0_9] : memref<96x16xf32, #tpu.memory_space<vmem>>, vector<7x7xf32>
    %c88 = arith.constant 88 : index
    %c0_10 = arith.constant 0 : index
    %9 = vector.load %arg2[%c88, %c0_10] : memref<96x16xf32, #tpu.memory_space<vmem>>, vector<1x10xf32>
    %c89 = arith.constant 89 : index
    %c0_11 = arith.constant 0 : index
    %10 = vector.load %arg2[%c89, %c0_11] : memref<96x16xf32, #tpu.memory_space<vmem>>, vector<1x7xf32>
    %c90 = arith.constant 90 : index
    %c0_12 = arith.constant 0 : index
    %11 = vector.load %arg2[%c90, %c0_12] : memref<96x16xf32, #tpu.memory_space<vmem>>, vector<1x7xf32>
    %c91 = arith.constant 91 : index
    %c0_13 = arith.constant 0 : index
    %12 = vector.load %arg2[%c91, %c0_13] : memref<96x16xf32, #tpu.memory_space<vmem>>, vector<1x1xf32>
    %c0_14 = arith.constant 0 : index
    %c0_15 = arith.constant 0 : index
    %13 = vector.load %arg1[%c0_14, %c0_15] : memref<512x10xf32, #tpu.memory_space<vmem>>, vector<512x10xf32>
    %cst = arith.constant dense<0.000000e+00> : vector<4x10xf32>
    %14 = tpu.matmul %0, %13, %cst {dimension_numbers = #tpu.dot_dimension_numbers<[1], [0], [0], [1], [0, 0, 1, 1], [], []>} : vector<4x512xf32>, vector<512x10xf32>, vector<4x10xf32> -> vector<4x10xf32>
    %15 = vector.broadcast %9 : vector<1x10xf32> to vector<4x10xf32>
    %16 = arith.addf %14, %15 : vector<4x10xf32>
    %cst_16 = arith.constant 0.000000e+00 : f32
    %17 = vector.broadcast %cst_16 : f32 to vector<4x10xf32>
    %18 = arith.maximumf %16, %17 : vector<4x10xf32>
    %cst_17 = arith.constant dense<0.000000e+00> : vector<4x7xf32>
    %19 = tpu.matmul %18, %1, %cst_17 {dimension_numbers = #tpu.dot_dimension_numbers<[1], [0], [0], [1], [0, 0, 1, 1], [], []>} : vector<4x10xf32>, vector<10x7xf32>, vector<4x7xf32> -> vector<4x7xf32>
    %20 = vector.broadcast %10 : vector<1x7xf32> to vector<4x7xf32>
    %21 = arith.addf %19, %20 : vector<4x7xf32>
    %cst_18 = arith.constant 0.000000e+00 : f32
    %22 = vector.broadcast %cst_18 : f32 to vector<4x7xf32>
    %23 = arith.maximumf %21, %22 : vector<4x7xf32>
    %24 = tpu.iota {dimensions = array<i32: 1>} : vector<4x7xi32>
    %cst_19 = arith.constant dense<0.000000e+00> : vector<4x7xf32>
    %25 = tpu.matmul %23, %7, %cst_19 {dimension_numbers = #tpu.dot_dimension_numbers<[1], [0], [0], [1], [0, 0, 1, 1], [], []>} : vector<4x7xf32>, vector<7x7xf32>, vector<4x7xf32> -> vector<4x7xf32>
    %cst_20 = arith.constant dense<0.000000e+00> : vector<4x7xf32>
    %26 = tpu.matmul %23, %8, %cst_20 {dimension_numbers = #tpu.dot_dimension_numbers<[1], [0], [0], [1], [0, 0, 1, 1], [], []>} : vector<4x7xf32>, vector<7x7xf32>, vector<4x7xf32> -> vector<4x7xf32>
    %27 = arith.mulf %25, %25 : vector<4x7xf32>
    %28 = arith.mulf %27, %25 : vector<4x7xf32>
    %29 = math.sin %25 : vector<4x7xf32>
    %30 = math.tanh %25 : vector<4x7xf32>
    %31 = arith.mulf %25, %26 : vector<4x7xf32>
    %cst_21 = arith.constant 9.99999993E-9 : f32
    %32 = vector.broadcast %cst_21 : f32 to vector<4x7xf32>
    %33 = arith.addf %26, %32 : vector<4x7xf32>
    %34 = tpu.reciprocal %33 : vector<4x7xf32> -> vector<4x7xf32>
    %35 = arith.mulf %25, %34 : vector<4x7xf32>
    %c0_i32 = arith.constant 0 : i32
    %36 = vector.broadcast %c0_i32 : i32 to vector<4x7xi32>
    %37 = arith.cmpi eq, %24, %36 : vector<4x7xi32>
    %c1_i32 = arith.constant 1 : i32
    %38 = vector.broadcast %c1_i32 : i32 to vector<4x7xi32>
    %39 = arith.cmpi eq, %24, %38 : vector<4x7xi32>
    %c2_i32 = arith.constant 2 : i32
    %40 = vector.broadcast %c2_i32 : i32 to vector<4x7xi32>
    %41 = arith.cmpi eq, %24, %40 : vector<4x7xi32>
    %c3_i32 = arith.constant 3 : i32
    %42 = vector.broadcast %c3_i32 : i32 to vector<4x7xi32>
    %43 = arith.cmpi eq, %24, %42 : vector<4x7xi32>
    %c4_i32 = arith.constant 4 : i32
    %44 = vector.broadcast %c4_i32 : i32 to vector<4x7xi32>
    %45 = arith.cmpi eq, %24, %44 : vector<4x7xi32>
    %cst_22 = arith.constant 0.000000e+00 : f32
    %46 = vector.broadcast %cst_22 : f32 to vector<4x7xf32>
    %47 = arith.select %45, %35, %46 : vector<4x7xi1>, vector<4x7xf32>
    %48 = arith.select %43, %31, %47 : vector<4x7xi1>, vector<4x7xf32>
    %49 = arith.select %41, %30, %48 : vector<4x7xi1>, vector<4x7xf32>
    %50 = arith.select %39, %29, %49 : vector<4x7xi1>, vector<4x7xf32>
    %51 = arith.select %37, %28, %50 : vector<4x7xi1>, vector<4x7xf32>
    %cst_23 = arith.constant dense<0.000000e+00> : vector<4x7xf32>
    %52 = tpu.matmul %18, %2, %cst_23 {dimension_numbers = #tpu.dot_dimension_numbers<[1], [0], [0], [1], [0, 0, 1, 1], [], []>} : vector<4x10xf32>, vector<10x7xf32>, vector<4x7xf32> -> vector<4x7xf32>
    %cst_24 = arith.constant dense<0.000000e+00> : vector<4x7xf32>
    %53 = tpu.matmul %51, %3, %cst_24 {dimension_numbers = #tpu.dot_dimension_numbers<[1], [0], [0], [1], [0, 0, 1, 1], [], []>} : vector<4x7xf32>, vector<7x7xf32>, vector<4x7xf32> -> vector<4x7xf32>
    %54 = arith.addf %52, %53 : vector<4x7xf32>
    %55 = vector.broadcast %11 : vector<1x7xf32> to vector<4x7xf32>
    %56 = arith.addf %54, %55 : vector<4x7xf32>
    %cst_25 = arith.constant 0.000000e+00 : f32
    %57 = vector.broadcast %cst_25 : f32 to vector<4x7xf32>
    %58 = arith.maximumf %56, %57 : vector<4x7xf32>
    %cst_26 = arith.constant dense<0.000000e+00> : vector<4x7xf32>
    %59 = tpu.matmul %58, %7, %cst_26 {dimension_numbers = #tpu.dot_dimension_numbers<[1], [0], [0], [1], [0, 0, 1, 1], [], []>} : vector<4x7xf32>, vector<7x7xf32>, vector<4x7xf32> -> vector<4x7xf32>
    %cst_27 = arith.constant dense<0.000000e+00> : vector<4x7xf32>
    %60 = tpu.matmul %58, %8, %cst_27 {dimension_numbers = #tpu.dot_dimension_numbers<[1], [0], [0], [1], [0, 0, 1, 1], [], []>} : vector<4x7xf32>, vector<7x7xf32>, vector<4x7xf32> -> vector<4x7xf32>
    %61 = arith.mulf %59, %59 : vector<4x7xf32>
    %62 = arith.mulf %61, %59 : vector<4x7xf32>
    %63 = math.sin %59 : vector<4x7xf32>
    %64 = math.tanh %59 : vector<4x7xf32>
    %65 = arith.mulf %59, %60 : vector<4x7xf32>
    %cst_28 = arith.constant 9.99999993E-9 : f32
    %66 = vector.broadcast %cst_28 : f32 to vector<4x7xf32>
    %67 = arith.addf %60, %66 : vector<4x7xf32>
    %68 = tpu.reciprocal %67 : vector<4x7xf32> -> vector<4x7xf32>
    %69 = arith.mulf %59, %68 : vector<4x7xf32>
    %c0_i32_29 = arith.constant 0 : i32
    %70 = vector.broadcast %c0_i32_29 : i32 to vector<4x7xi32>
    %71 = arith.cmpi eq, %24, %70 : vector<4x7xi32>
    %c1_i32_30 = arith.constant 1 : i32
    %72 = vector.broadcast %c1_i32_30 : i32 to vector<4x7xi32>
    %73 = arith.cmpi eq, %24, %72 : vector<4x7xi32>
    %c2_i32_31 = arith.constant 2 : i32
    %74 = vector.broadcast %c2_i32_31 : i32 to vector<4x7xi32>
    %75 = arith.cmpi eq, %24, %74 : vector<4x7xi32>
    %c3_i32_32 = arith.constant 3 : i32
    %76 = vector.broadcast %c3_i32_32 : i32 to vector<4x7xi32>
    %77 = arith.cmpi eq, %24, %76 : vector<4x7xi32>
    %c4_i32_33 = arith.constant 4 : i32
    %78 = vector.broadcast %c4_i32_33 : i32 to vector<4x7xi32>
    %79 = arith.cmpi eq, %24, %78 : vector<4x7xi32>
    %cst_34 = arith.constant 0.000000e+00 : f32
    %80 = vector.broadcast %cst_34 : f32 to vector<4x7xf32>
    %81 = arith.select %79, %69, %80 : vector<4x7xi1>, vector<4x7xf32>
    %82 = arith.select %77, %65, %81 : vector<4x7xi1>, vector<4x7xf32>
    %83 = arith.select %75, %64, %82 : vector<4x7xi1>, vector<4x7xf32>
    %84 = arith.select %73, %63, %83 : vector<4x7xi1>, vector<4x7xf32>
    %85 = arith.select %71, %62, %84 : vector<4x7xi1>, vector<4x7xf32>
    %cst_35 = arith.constant dense<0.000000e+00> : vector<4x1xf32>
    %86 = tpu.matmul %18, %4, %cst_35 {dimension_numbers = #tpu.dot_dimension_numbers<[1], [0], [0], [1], [0, 0, 1, 1], [], []>} : vector<4x10xf32>, vector<10x1xf32>, vector<4x1xf32> -> vector<4x1xf32>
    %cst_36 = arith.constant dense<0.000000e+00> : vector<4x1xf32>
    %87 = tpu.matmul %51, %5, %cst_36 {dimension_numbers = #tpu.dot_dimension_numbers<[1], [0], [0], [1], [0, 0, 1, 1], [], []>} : vector<4x7xf32>, vector<7x1xf32>, vector<4x1xf32> -> vector<4x1xf32>
    %88 = arith.addf %86, %87 : vector<4x1xf32>
    %cst_37 = arith.constant dense<0.000000e+00> : vector<4x1xf32>
    %89 = tpu.matmul %85, %6, %cst_37 {dimension_numbers = #tpu.dot_dimension_numbers<[1], [0], [0], [1], [0, 0, 1, 1], [], []>} : vector<4x7xf32>, vector<7x1xf32>, vector<4x1xf32> -> vector<4x1xf32>
    %90 = arith.addf %88, %89 : vector<4x1xf32>
    %91 = vector.broadcast %12 : vector<1x1xf32> to vector<4x1xf32>
    %92 = arith.addf %90, %91 : vector<4x1xf32>
    %c0_38 = arith.constant 0 : index
    %c0_39 = arith.constant 0 : index
    %93 = vector.load %arg3[%c0_38, %c0_39] : memref<4x1xf32, #tpu.memory_space<vmem>>, vector<4x1xf32>
    tpu.vector_store %arg3[%c0_38, %c0_39], %92 {strides = array<i32>} : memref<4x1xf32, #tpu.memory_space<vmem>>, vector<4x1xf32>,
    return
  }
}

</mosaic_0001>

<llo_original>
// kernel: tpu_custom_call.1
$region0: #{tpu_custom_call.1}
  #allocation0 [shape = 'u32[]', space=smem, size = 0x4, offset = 0x4, fixed_abs, tag = 'smem constant byte address 0x4 - core index']
  #allocation1 [shape = 'u32[144,128]{1,0:T(1,128)}', space=vmem, size = 0x12000, scoped, tag = 'internal scratch']
  %s0 = inlined_call_operand.vmem [shape: f32[4,512], index: 0, kind: input, shape index: {}]
  %s1 = inlined_call_operand.vmem [shape: f32[512,10], index: 1, kind: input, shape index: {}]
  %s2 = inlined_call_operand.vmem [shape: f32[96,16], index: 2, kind: input, shape index: {}]
  %s3 = inlined_call_operand.vmem [shape: f32[4,1], index: 3, kind: output, shape index: {}]
  %s4 = sld [smem:[#allocation0]]
  $region22: #{tpu_custom_call.1} parent=0
    _
  %s6 = ssub.s32 1, %s4
  %s7 = scalar_select 0, %s6, %s4
  // Predicated region
  $region2: #{tpu_custom_call.1} parent=0 // pred_check
    _
  $region3: #{tpu_custom_call.1} parent=0 // pred_check_branch
    %9 = sbr.rel (0) target = $region5
  $region4: #{tpu_custom_call.1} parent=0 // pred_region
    _
  $region5: #{tpu_custom_call.1} parent=0 // pred_fallthru
    _
  // Predicated region
  $region6: #{tpu_custom_call.1} parent=0 // pred_check
    _
  $region7: #{tpu_custom_call.1} parent=0 // pred_check_branch
    %11 = sbr.rel (0) target = $region9
  $region8: #{tpu_custom_call.1} parent=0 // pred_region
    _
  $region9: #{tpu_custom_call.1} parent=0 // pred_fallthru
    _
  // Predicated region
  $region10: #{tpu_custom_call.1} parent=0 // pred_check
    _
  $region11: #{tpu_custom_call.1} parent=0 // pred_check_branch
    %13 = sbr.rel (0) target = $region13
  $region12: #{tpu_custom_call.1} parent=0 // pred_region
    _
  $region13: #{tpu_custom_call.1} parent=0 // pred_fallthru
    _
  %v14 = vld [vmem:[%s0] sm:$0xff]
  %v15 = vld [vmem:[%s0 + $0x8] sm:$0xff]
  %v16 = vld [vmem:[%s2] sm:$0xff]
  %v17 = vld [vmem:[%s2 + $0x8] sm:$0x3]
  %v18 = vld [vmem:[%s2 + $0x10] sm:$0xff]
  %v19 = vld [vmem:[%s2 + $0x18] sm:$0x3]
  %v20 = vld [vmem:[%s2 + $0x20] sm:$0x7f]
  %v21 = vld [vmem:[%s2 + $0x28] sm:$0xff]
  %v22 = vld [vmem:[%s2 + $0x30] sm:$0x3]
  %v23 = vld [vmem:[%s2 + $0x38] sm:$0x7f]
  %v24 = vld [vmem:[%s2 + $0x40] sm:$0x7f]
  %v25 = vld [vmem:[%s2 + $0x48] sm:$0x7f]
  %v26 = vld [vmem:[%s2 + $0x50] sm:$0x7f]
  %v27 = vld [vmem:[%s2 + $0x58] sm:$0x1]
  %v28 = vld [vmem:[%s2 + $0x59] sm:$0x1]
  %v29 = vld [vmem:[%s2 + $0x5a] sm:$0x1]
  %v30 = vld [vmem:[%s2 + $0x5b] sm:$0x1]
  %v31 = vld [vmem:[%s1] sm:$0xff]
  %v32 = vld [vmem:[%s1 + $0x8] sm:$0xff]
  %v33 = vld [vmem:[%s1 + $0x10] sm:$0xff]
  %v34 = vld [vmem:[%s1 + $0x18] sm:$0xff]
  %v35 = vld [vmem:[%s1 + $0x20] sm:$0xff]
  %v36 = vld [vmem:[%s1 + $0x28] sm:$0xff]
  %v37 = vld [vmem:[%s1 + $0x30] sm:$0xff]
  %v38 = vld [vmem:[%s1 + $0x38] sm:$0xff]
  %v39 = vld [vmem:[%s1 + $0x40] sm:$0xff]
  %v40 = vld [vmem:[%s1 + $0x48] sm:$0xff]
  %v41 = vld [vmem:[%s1 + $0x50] sm:$0xff]
  %v42 = vld [vmem:[%s1 + $0x58] sm:$0xff]
  %v43 = vld [vmem:[%s1 + $0x60] sm:$0xff]
  %v44 = vld [vmem:[%s1 + $0x68] sm:$0xff]
  %v45 = vld [vmem:[%s1 + $0x70] sm:$0xff]
  %v46 = vld [vmem:[%s1 + $0x78] sm:$0xff]
  %v47 = vld [vmem:[%s1 + $0x80] sm:$0xff]
  %v48 = vld [vmem:[%s1 + $0x88] sm:$0xff]
  %v49 = vld [vmem:[%s1 + $0x90] sm:$0xff]
  %v50 = vld [vmem:[%s1 + $0x98] sm:$0xff]
  %v51 = vld [vmem:[%s1 + $0xa0] sm:$0xff]
  %v52 = vld [vmem:[%s1 + $0xa8] sm:$0xff]
  %v53 = vld [vmem:[%s1 + $0xb0] sm:$0xff]
  %v54 = vld [vmem:[%s1 + $0xb8] sm:$0xff]
  %v55 = vld [vmem:[%s1 + $0xc0] sm:$0xff]
  %v56 = vld [vmem:[%s1 + $0xc8] sm:$0xff]
  %v57 = vld [vmem:[%s1 + $0xd0] sm:$0xff]
  %v58 = vld [vmem:[%s1 + $0xd8] sm:$0xff]
  %v59 = vld [vmem:[%s1 + $0xe0] sm:$0xff]
  %v60 = vld [vmem:[%s1 + $0xe8] sm:$0xff]
  %v61 = vld [vmem:[%s1 + $0xf0] sm:$0xff]
  %v62 = vld [vmem:[%s1 + $0xf8] sm:$0xff]
  %v63 = vld [vmem:[%s1 + $0x100] sm:$0xff]
  %v64 = vld [vmem:[%s1 + $0x108] sm:$0xff]
  %v65 = vld [vmem:[%s1 + $0x110] sm:$0xff]
  %v66 = vld [vmem:[%s1 + $0x118] sm:$0xff]
  %v67 = vld [vmem:[%s1 + $0x120] sm:$0xff]
  %v68 = vld [vmem:[%s1 + $0x128] sm:$0xff]
  %v69 = vld [vmem:[%s1 + $0x130] sm:$0xff]
  %v70 = vld [vmem:[%s1 + $0x138] sm:$0xff]
  %v71 = vld [vmem:[%s1 + $0x140] sm:$0xff]
  %v72 = vld [vmem:[%s1 + $0x148] sm:$0xff]
  %v73 = vld [vmem:[%s1 + $0x150] sm:$0xff]
  %v74 = vld [vmem:[%s1 + $0x158] sm:$0xff]
  %v75 = vld [vmem:[%s1 + $0x160] sm:$0xff]
  %v76 = vld [vmem:[%s1 + $0x168] sm:$0xff]
  %v77 = vld [vmem:[%s1 + $0x170] sm:$0xff]
  %v78 = vld [vmem:[%s1 + $0x178] sm:$0xff]
  %v79 = vld [vmem:[%s1 + $0x180] sm:$0xff]
  %v80 = vld [vmem:[%s1 + $0x188] sm:$0xff]
  %v81 = vld [vmem:[%s1 + $0x190] sm:$0xff]
  %v82 = vld [vmem:[%s1 + $0x198] sm:$0xff]
  %v83 = vld [vmem:[%s1 + $0x1a0] sm:$0xff]
  %v84 = vld [vmem:[%s1 + $0x1a8] sm:$0xff]
  %v85 = vld [vmem:[%s1 + $0x1b0] sm:$0xff]
  %v86 = vld [vmem:[%s1 + $0x1b8] sm:$0xff]
  %v87 = vld [vmem:[%s1 + $0x1c0] sm:$0xff]
  %v88 = vld [vmem:[%s1 + $0x1c8] sm:$0xff]
  %v89 = vld [vmem:[%s1 + $0x1d0] sm:$0xff]
  %v90 = vld [vmem:[%s1 + $0x1d8] sm:$0xff]
  %v91 = vld [vmem:[%s1 + $0x1e0] sm:$0xff]
  %v92 = vld [vmem:[%s1 + $0x1e8] sm:$0xff]
  %v93 = vld [vmem:[%s1 + $0x1f0] sm:$0xff]
  %v94 = vld [vmem:[%s1 + $0x1f8] sm:$0xff]
  %v95 = vlaneseq
  %v96 = vshrl.u32 %v95, 7
  %v97 = vsub.s32 0, %v96
  %v98 = vrot.slane %v27, %v97
  %v101 = vcombine.high %v14, %v14
  %v102 = vcombine.high %v15, %v15
  %105 = vmatprep.subr.mxu0 0.0
  %106 = vmatpush1.msra.mxu0 %v31
  %107 = vmatprep.subr.mxu0 0.0
  %108 = vmatpush1.msra.mxu0 %v32
  %109 = vmatprep.subr.mxu0 0.0
  %110 = vmatpush1.msra.mxu0 %v33
  %111 = vmatprep.subr.mxu0 0.0
  %112 = vmatpush1.msra.mxu0 %v34
  %113 = vmatprep.subr.mxu0 0.0
  %114 = vmatpush1.msra.mxu0 %v35
  %115 = vmatprep.subr.mxu0 0.0
  %116 = vmatpush1.msra.mxu0 %v36
  %117 = vmatprep.subr.mxu0 0.0
  %118 = vmatpush1.msra.mxu0 %v37
  %119 = vmatprep.subr.mxu0 0.0
  %120 = vmatpush1.msra.mxu0 %v38
  %121 = vmatprep.subr.mxu0 0.0
  %122 = vmatpush1.msra.mxu0 %v39
  %123 = vmatprep.subr.mxu0 0.0
  %124 = vmatpush1.msra.mxu0 %v40
  %125 = vmatprep.subr.mxu0 0.0
  %126 = vmatpush1.msra.mxu0 %v41
  %127 = vmatprep.subr.mxu0 0.0
  %128 = vmatpush1.msra.mxu0 %v42
  %129 = vmatprep.subr.mxu0 0.0
  %130 = vmatpush1.msra.mxu0 %v43
  %131 = vmatprep.subr.mxu0 0.0
  %132 = vmatpush1.msra.mxu0 %v44
  %133 = vmatprep.subr.mxu0 0.0
  %134 = vmatpush1.msra.mxu0 %v45
  %135 = vmatprep.subr.mxu0 0.0
  %136 = vmatpush1.msra.mxu0 %v46
  %137 = vmatprep.subr.mxu0 0.0
  %138 = vmatpush1.msra.mxu0 %v47
  %139 = vmatprep.subr.mxu0 0.0
  %140 = vmatpush1.msra.mxu0 %v48
  %141 = vmatprep.subr.mxu0 0.0
  %142 = vmatpush1.msra.mxu0 %v49
  %143 = vmatprep.subr.mxu0 0.0
  %144 = vmatpush1.msra.mxu0 %v50
  %145 = vmatprep.subr.mxu0 0.0
  %146 = vmatpush1.msra.mxu0 %v51
  %147 = vmatprep.subr.mxu0 0.0
  %148 = vmatpush1.msra.mxu0 %v52
  %149 = vmatprep.subr.mxu0 0.0
  %150 = vmatpush1.msra.mxu0 %v53
  %151 = vmatprep.subr.mxu0 0.0
  %152 = vmatpush1.msra.mxu0 %v54
  %153 = vmatprep.subr.mxu0 0.0
  %154 = vmatpush1.msra.mxu0 %v55
  %155 = vmatprep.subr.mxu0 0.0
  %156 = vmatpush1.msra.mxu0 %v56
  %157 = vmatprep.subr.mxu0 0.0
  %158 = vmatpush1.msra.mxu0 %v57
  %159 = vmatprep.subr.mxu0 0.0
  %160 = vmatpush1.msra.mxu0 %v58
  %161 = vmatprep.subr.mxu0 0.0
  %162 = vmatpush1.msra.mxu0 %v59
  %163 = vmatprep.subr.mxu0 0.0
  %164 = vmatpush1.msra.mxu0 %v60
  %165 = vmatprep.subr.mxu0 0.0
  %166 = vmatpush1.msra.mxu0 %v61
  %167 = vmatprep.subr.mxu0 0.0
  %168 = vmatpush1.msra.mxu0 %v62
  %169 = vmatprep.mubr.f32.mxu0 %v101
  %170 = vmatmul.mubr.f32.gmra.mrb[0].mxu0 %v14
  %v171 = vpop.f32.mrb[0].mxu0
  %v172 = vadd.f32 %v98, %v171
  %v173 = vpop.f32.mrb[0].mxu0
  %174 = vdwg.mxu0
  %175 = vmatprep.subr.mxu0 0.0
  %176 = vmatpush1.msra.mxu0 %v63
  %177 = vmatprep.subr.mxu0 0.0
  %178 = vmatpush1.msra.mxu0 %v64
  %179 = vmatprep.subr.mxu0 0.0
  %180 = vmatpush1.msra.mxu0 %v65
  %181 = vmatprep.subr.mxu0 0.0
  %182 = vmatpush1.msra.mxu0 %v66
  %183 = vmatprep.subr.mxu0 0.0
  %184 = vmatpush1.msra.mxu0 %v67
  %185 = vmatprep.subr.mxu0 0.0
  %186 = vmatpush1.msra.mxu0 %v68
  %187 = vmatprep.subr.mxu0 0.0
  %188 = vmatpush1.msra.mxu0 %v69
  %189 = vmatprep.subr.mxu0 0.0
  %190 = vmatpush1.msra.mxu0 %v70
  %191 = vmatprep.subr.mxu0 0.0
  %192 = vmatpush1.msra.mxu0 %v71
  %193 = vmatprep.subr.mxu0 0.0
  %194 = vmatpush1.msra.mxu0 %v72
  %195 = vmatprep.subr.mxu0 0.0
  %196 = vmatpush1.msra.mxu0 %v73
  %197 = vmatprep.subr.mxu0 0.0
  %198 = vmatpush1.msra.mxu0 %v74
  %199 = vmatprep.subr.mxu0 0.0
  %200 = vmatpush1.msra.mxu0 %v75
  %201 = vmatprep.subr.mxu0 0.0
  %202 = vmatpush1.msra.mxu0 %v76
  %203 = vmatprep.subr.mxu0 0.0
  %204 = vmatpush1.msra.mxu0 %v77
  %205 = vmatprep.subr.mxu0 0.0
  %206 = vmatpush1.msra.mxu0 %v78
  %207 = vmatprep.subr.mxu0 0.0
  %208 = vmatpush1.msra.mxu0 %v79
  %209 = vmatprep.subr.mxu0 0.0
  %210 = vmatpush1.msra.mxu0 %v80
  %211 = vmatprep.subr.mxu0 0.0
  %212 = vmatpush1.msra.mxu0 %v81
  %213 = vmatprep.subr.mxu0 0.0
  %214 = vmatpush1.msra.mxu0 %v82
  %215 = vmatprep.subr.mxu0 0.0
  %216 = vmatpush1.msra.mxu0 %v83
  %217 = vmatprep.subr.mxu0 0.0
  %218 = vmatpush1.msra.mxu0 %v84
  %219 = vmatprep.subr.mxu0 0.0
  %220 = vmatpush1.msra.mxu0 %v85
  %221 = vmatprep.subr.mxu0 0.0
  %222 = vmatpush1.msra.mxu0 %v86
  %223 = vmatprep.subr.mxu0 0.0
  %224 = vmatpush1.msra.mxu0 %v87
  %225 = vmatprep.subr.mxu0 0.0
  %226 = vmatpush1.msra.mxu0 %v88
  %227 = vmatprep.subr.mxu0 0.0
  %228 = vmatpush1.msra.mxu0 %v89
  %229 = vmatprep.subr.mxu0 0.0
  %230 = vmatpush1.msra.mxu0 %v90
  %231 = vmatprep.subr.mxu0 0.0
  %232 = vmatpush1.msra.mxu0 %v91
  %233 = vmatprep.subr.mxu0 0.0
  %234 = vmatpush1.msra.mxu0 %v92
  %235 = vmatprep.subr.mxu0 0.0
  %236 = vmatpush1.msra.mxu0 %v93
  %237 = vmatprep.subr.mxu0 0.0
  %238 = vmatpush1.msra.mxu0 %v94
  %239 = vmatprep.mubr.f32.mxu0 %v102
  %240 = vmatmul.mubr.f32.gmra.mrb[0].mxu0 %v15
  %v241 = vpop.f32.mrb[0].mxu0
  %v242 = vadd.f32 %v172, %v241
  %v243 = vpop.f32.mrb[0].mxu0
  %244 = vdwg.mxu0
  %v245 = vmax.f32 %v242, 0.0
  %v246 = vlaneseq
  %v247 = vshrl.u32 %v246, 7
  %v248 = vsub.s32 0, %v247
  %v249 = vrot.slane %v28, %v248
  %vm250 = vcmask 80896
  %v252 = vsel %vm250, %v245, 0
  %vm254 = vcmask 1041408
  %v256 = vsel %vm254, %v17, 0
  %258 = vmatprep.subr.mxu0 0.0
  %259 = vmatpush1.msra.mxu0 %v16
  %260 = vmatprep.subr.mxu0 0.0
  %261 = vmatpush1.msra.mxu0 %v256
  %262 = vmatprep.subr.mxu0 0.0
  %263 = vmatpush1.msra.mxu0 0.0
  %264 = vmatprep.subr.mxu0 0.0
  %265 = vmatpush1.msra.mxu0 0.0
  %266 = vmatprep.subr.mxu0 0.0
  %267 = vmatpush1.msra.mxu0 0.0
  %268 = vmatprep.subr.mxu0 0.0
  %269 = vmatpush1.msra.mxu0 0.0
  %270 = vmatprep.subr.mxu0 0.0
  %271 = vmatpush1.msra.mxu0 0.0
  %272 = vmatprep.subr.mxu0 0.0
  %273 = vmatpush1.msra.mxu0 0.0
  %274 = vmatprep.subr.mxu0 0.0
  %275 = vmatpush1.msra.mxu0 0.0
  %276 = vmatprep.subr.mxu0 0.0
  %277 = vmatpush1.msra.mxu0 0.0
  %278 = vmatprep.subr.mxu0 0.0
  %279 = vmatpush1.msra.mxu0 0.0
  %280 = vmatprep.subr.mxu0 0.0
  %281 = vmatpush1.msra.mxu0 0.0
  %282 = vmatprep.subr.mxu0 0.0
  %283 = vmatpush1.msra.mxu0 0.0
  %284 = vmatprep.subr.mxu0 0.0
  %285 = vmatpush1.msra.mxu0 0.0
  %286 = vmatprep.subr.mxu0 0.0
  %287 = vmatpush1.msra.mxu0 0.0
  %288 = vmatprep.subr.mxu0 0.0
  %289 = vmatpush1.msra.mxu0 0.0
  %290 = vmatprep.subr.mxu0 0.0
  %291 = vmatpush1.msra.mxu0 0.0
  %292 = vmatprep.subr.mxu0 0.0
  %293 = vmatpush1.msra.mxu0 0.0
  %294 = vmatprep.subr.mxu0 0.0
  %295 = vmatpush1.msra.mxu0 0.0
  %296 = vmatprep.subr.mxu0 0.0
  %297 = vmatpush1.msra.mxu0 0.0
  %298 = vmatprep.subr.mxu0 0.0
  %299 = vmatpush1.msra.mxu0 0.0
  %300 = vmatprep.subr.mxu0 0.0
  %301 = vmatpush1.msra.mxu0 0.0
  %302 = vmatprep.subr.mxu0 0.0
  %303 = vmatpush1.msra.mxu0 0.0
  %304 = vmatprep.subr.mxu0 0.0
  %305 = vmatpush1.msra.mxu0 0.0
  %306 = vmatprep.subr.mxu0 0.0
  %307 = vmatpush1.msra.mxu0 0.0
  %308 = vmatprep.subr.mxu0 0.0
  %309 = vmatpush1.msra.mxu0 0.0
  %310 = vmatprep.subr.mxu0 0.0
  %311 = vmatpush1.msra.mxu0 0.0
  %312 = vmatprep.subr.mxu0 0.0
  %313 = vmatpush1.msra.mxu0 0.0
  %314 = vmatprep.subr.mxu0 0.0
  %315 = vmatpush1.msra.mxu0 0.0
  %316 = vmatprep.subr.mxu0 0.0
  %317 = vmatpush1.msra.mxu0 0.0
  %318 = vmatprep.subr.mxu0 0.0
  %319 = vmatpush1.msra.mxu0 0.0
  %320 = vmatprep.subr.mxu0 0.0
  %321 = vmatpush1.msra.mxu0 0.0
  %322 = vmatprep.mubr.f32.mxu0 0.0
  %323 = vmatmul.mubr.f32.gmra.mrb[0].mxu0 %v252
  %v324 = vpop.f32.mrb[0].mxu0
  %v325 = vadd.f32 %v249, %v324
  %v326 = vpop.f32.mrb[0].mxu0
  %327 = vdwg.mxu0
  %v328 = vmax.f32 %v325, 0.0
  %v329 = vlaneseq
  %v330 = vand.u32 %v329, 127
  %vm331 = vcmask 56320
  %v333 = vsel %vm331, %v328, 0
  %vm335 = vcmask 1046528
  %v337 = vsel %vm335, %v25, 0
  %339 = vmatprep.subr.mxu0 0.0
  %340 = vmatpush1.msra.mxu0 %v337
  %341 = vmatprep.subr.mxu0 0.0
  %342 = vmatpush1.msra.mxu0 0.0
  %343 = vmatprep.subr.mxu0 0.0
  %344 = vmatpush1.msra.mxu0 0.0
  %345 = vmatprep.subr.mxu0 0.0
  %346 = vmatpush1.msra.mxu0 0.0
  %347 = vmatprep.subr.mxu0 0.0
  %348 = vmatpush1.msra.mxu0 0.0
  %349 = vmatprep.subr.mxu0 0.0
  %350 = vmatpush1.msra.mxu0 0.0
  %351 = vmatprep.subr.mxu0 0.0
  %352 = vmatpush1.msra.mxu0 0.0
  %353 = vmatprep.subr.mxu0 0.0
  %354 = vmatpush1.msra.mxu0 0.0
  %355 = vmatprep.subr.mxu0 0.0
  %356 = vmatpush1.msra.mxu0 0.0
  %357 = vmatprep.subr.mxu0 0.0
  %358 = vmatpush1.msra.mxu0 0.0
  %359 = vmatprep.subr.mxu0 0.0
  %360 = vmatpush1.msra.mxu0 0.0
  %361 = vmatprep.subr.mxu0 0.0
  %362 = vmatpush1.msra.mxu0 0.0
  %363 = vmatprep.subr.mxu0 0.0
  %364 = vmatpush1.msra.mxu0 0.0
  %365 = vmatprep.subr.mxu0 0.0
  %366 = vmatpush1.msra.mxu0 0.0
  %367 = vmatprep.subr.mxu0 0.0
  %368 = vmatpush1.msra.mxu0 0.0
  %369 = vmatprep.subr.mxu0 0.0
  %370 = vmatpush1.msra.mxu0 0.0
  %371 = vmatprep.subr.mxu0 0.0
  %372 = vmatpush1.msra.mxu0 0.0
  %373 = vmatprep.subr.mxu0 0.0
  %374 = vmatpush1.msra.mxu0 0.0
  %375 = vmatprep.subr.mxu0 0.0
  %376 = vmatpush1.msra.mxu0 0.0
  %377 = vmatprep.subr.mxu0 0.0
  %378 = vmatpush1.msra.mxu0 0.0
  %379 = vmatprep.subr.mxu0 0.0
  %380 = vmatpush1.msra.mxu0 0.0
  %381 = vmatprep.subr.mxu0 0.0
  %382 = vmatpush1.msra.mxu0 0.0
  %383 = vmatprep.subr.mxu0 0.0
  %384 = vmatpush1.msra.mxu0 0.0
  %385 = vmatprep.subr.mxu0 0.0
  %386 = vmatpush1.msra.mxu0 0.0
  %387 = vmatprep.subr.mxu0 0.0
  %388 = vmatpush1.msra.mxu0 0.0
  %389 = vmatprep.subr.mxu0 0.0
  %390 = vmatpush1.msra.mxu0 0.0
  %391 = vmatprep.subr.mxu0 0.0
  %392 = vmatpush1.msra.mxu0 0.0
  %393 = vmatprep.subr.mxu0 0.0
  %394 = vmatpush1.msra.mxu0 0.0
  %395 = vmatprep.subr.mxu0 0.0
  %396 = vmatpush1.msra.mxu0 0.0
  %397 = vmatprep.subr.mxu0 0.0
  %398 = vmatpush1.msra.mxu0 0.0
  %399 = vmatprep.subr.mxu0 0.0
  %400 = vmatpush1.msra.mxu0 0.0
  %401 = vmatprep.subr.mxu0 0.0
  %402 = vmatpush1.msra.mxu0 0.0
  %403 = vmatprep.mubr.f32.mxu0 0.0
  %404 = vmatmul.mubr.f32.gmra.mrb[0].mxu0 %v333
  %v405 = vpop.f32.mrb[0].mxu0
  %v406 = vadd.f32 0.0, %v405
  %v407 = vpop.f32.mrb[0].mxu0
  %408 = vdwg.mxu0
  %v410 = vsel %vm335, %v26, 0
  %412 = vmatprep.subr.mxu0 0.0
  %413 = vmatpush1.msra.mxu0 %v410
  %414 = vmatprep.subr.mxu0 0.0
  %415 = vmatpush1.msra.mxu0 0.0
  %416 = vmatprep.subr.mxu0 0.0
  %417 = vmatpush1.msra.mxu0 0.0
  %418 = vmatprep.subr.mxu0 0.0
  %419 = vmatpush1.msra.mxu0 0.0
  %420 = vmatprep.subr.mxu0 0.0
  %421 = vmatpush1.msra.mxu0 0.0
  %422 = vmatprep.subr.mxu0 0.0
  %423 = vmatpush1.msra.mxu0 0.0
  %424 = vmatprep.subr.mxu0 0.0
  %425 = vmatpush1.msra.mxu0 0.0
  %426 = vmatprep.subr.mxu0 0.0
  %427 = vmatpush1.msra.mxu0 0.0
  %428 = vmatprep.subr.mxu0 0.0
  %429 = vmatpush1.msra.mxu0 0.0
  %430 = vmatprep.subr.mxu0 0.0
  %431 = vmatpush1.msra.mxu0 0.0
  %432 = vmatprep.subr.mxu0 0.0
  %433 = vmatpush1.msra.mxu0 0.0
  %434 = vmatprep.subr.mxu0 0.0
  %435 = vmatpush1.msra.mxu0 0.0
  %436 = vmatprep.subr.mxu0 0.0
  %437 = vmatpush1.msra.mxu0 0.0
  %438 = vmatprep.subr.mxu0 0.0
  %439 = vmatpush1.msra.mxu0 0.0
  %440 = vmatprep.subr.mxu0 0.0
  %441 = vmatpush1.msra.mxu0 0.0
  %442 = vmatprep.subr.mxu0 0.0
  %443 = vmatpush1.msra.mxu0 0.0
  %444 = vmatprep.subr.mxu0 0.0
  %445 = vmatpush1.msra.mxu0 0.0
  %446 = vmatprep.subr.mxu0 0.0
  %447 = vmatpush1.msra.mxu0 0.0
  %448 = vmatprep.subr.mxu0 0.0
  %449 = vmatpush1.msra.mxu0 0.0
  %450 = vmatprep.subr.mxu0 0.0
  %451 = vmatpush1.msra.mxu0 0.0
  %452 = vmatprep.subr.mxu0 0.0
  %453 = vmatpush1.msra.mxu0 0.0
  %454 = vmatprep.subr.mxu0 0.0
  %455 = vmatpush1.msra.mxu0 0.0
  %456 = vmatprep.subr.mxu0 0.0
  %457 = vmatpush1.msra.mxu0 0.0
  %458 = vmatprep.subr.mxu0 0.0
  %459 = vmatpush1.msra.mxu0 0.0
  %460 = vmatprep.subr.mxu0 0.0
  %461 = vmatpush1.msra.mxu0 0.0
  %462 = vmatprep.subr.mxu0 0.0
  %463 = vmatpush1.msra.mxu0 0.0
  %464 = vmatprep.subr.mxu0 0.0
  %465 = vmatpush1.msra.mxu0 0.0
  %466 = vmatprep.subr.mxu0 0.0
  %467 = vmatpush1.msra.mxu0 0.0
  %468 = vmatprep.subr.mxu0 0.0
  %469 = vmatpush1.msra.mxu0 0.0
  %470 = vmatprep.subr.mxu0 0.0
  %471 = vmatpush1.msra.mxu0 0.0
  %472 = vmatprep.subr.mxu0 0.0
  %473 = vmatpush1.msra.mxu0 0.0
  %474 = vmatprep.subr.mxu0 0.0
  %475 = vmatpush1.msra.mxu0 0.0
  %476 = vmatprep.mubr.f32.mxu0 0.0
  %477 = vmatmul.mubr.f32.gmra.mrb[0].mxu0 %v333
  %v478 = vpop.f32.mrb[0].mxu0
  %v479 = vadd.f32 0.0, %v478
  %v480 = vpop.f32.mrb[0].mxu0
  %481 = vdwg.mxu0
  %v482 = vmul.f32 %v406, %v406
  %v483 = vmul.f32 %v482, %v406
  %v484 = vand.u32 2147483647, %v406
  %vm485 = vcmp.le.f32.partialorder %v484, 0.7853982
  %vm486 = vcmp.lt.s32.totalorder %v406, 0
  %v487 = vand.u32 %v406, 2139095040
  %v488 = vshrl.u32 %v487, 23
  %v489 = vsub.s32 %v488, 127
  %v490 = vand.u32 2147483647, %v406
  %v491 = vand.u32 %v490, 8388607
  %v492 = vor.u32 %v491, 8388608
  %v493 = vsub.s32 0, %v492
  %v494 = vadd.s32 %v489, 1
  %vm495 = vcmp.gt.s32.totalorder %v494, 0
  %v496 = vsel %vm495, %v494, 0
  %v497 = vshrl.u32 %v496, 5
  %v498 = vand.u32 %v496, 31
  %v499 = vsub.s32 32, %v498
  %v500 = vshrl.u32 683565275, %v499
  %v501 = vshll.u32 683565275, %v498
  %v502 = vshrl.u32 2475754826, %v499
  %v503 = vor.u32 %v501, %v502
  %v504 = vshll.u32 2475754826, %v498
  %v505 = vshrl.u32 2131351028, %v499
  %v506 = vor.u32 %v504, %v505
  %v507 = vshll.u32 2131351028, %v498
  %v508 = vshrl.u32 2102212464, %v499
  %v509 = vor.u32 %v507, %v508
  %v510 = vshll.u32 2102212464, %v498
  %v511 = vshrl.u32 920167782, %v499
  %v512 = vor.u32 %v510, %v511
  %v513 = vshll.u32 920167782, %v498
  %v514 = vshrl.u32 1326507024, %v499
  %v515 = vor.u32 %v513, %v514
  %vm516 = vcmp.lt.s32.totalorder %v497, 1
  %vm517 = vcmp.lt.s32.totalorder %v497, 2
  %vm518 = vcmp.lt.s32.totalorder %v497, 3
  %vm519 = vcmp.lt.s32.totalorder %v497, 4
  %v520 = vsel %vm516, %v500, %v503
  %v521 = vsel %vm519, %v509, 2102212464
  %v522 = vsel %vm518, %v506, %v521
  %v523 = vsel %vm517, %v520, %v522
  %v524 = vsel %vm516, %v503, %v506
  %v525 = vsel %vm519, %v512, 920167782
  %v526 = vsel %vm518, %v509, %v525
  %v527 = vsel %vm517, %v524, %v526
  %v528 = vsel %vm516, %v506, %v509
  %v529 = vsel %vm519, %v515, 1326507024
  %v530 = vsel %vm518, %v512, %v529
  %v531 = vsel %vm517, %v528, %v530
  %v532 = vshll.u32 %v492, 8
  %v533 = vmul.u32.u64.compose %v532, %v531
  %v534 = vextract.low.u32 %v533
  %v535 = vextract.high.u32 %v533
  %v536 = vmul.u32.u64.compose %v532, %v527
  %v537 = vextract.low.u32 %v536
  %v538 = vextract.high.u32 %v536
  %v539 = vmul.u32 %v532, %v523
  %v540 = vadd.s32 %v535, %v537
  %vm541 = vc.u32 %v535, %v537
  %v542 = vadd.s32 %v538, 1
  %v543 = vsel %vm541, %v542, %v538
  %v544 = vadd.s32 %v539, %v543
  %v545 = vadd.s32 %v544, 536870912
  %v546 = vshrl.u32 %v545, 30
  %v547 = vshll.u32 %v546, 30
  %v548 = vsub.s32 %v544, %v547
  %vm549 = vcmp.lt.s32.totalorder %v548, 0
  %v550 = vsub.s32 0, %v548
  %v551 = vsel %vm549, %v550, %v548
  %v552 = vclz %v551
  %v553 = vsub.s32 %v552, 2
  %vm554 = vcmp.gt.s32.totalorder 0, %v553
  %v555 = vsel %vm554, 0, %v553
  %v556 = vsub.s32 32, %v555
  %v557 = vshll.u32 %v548, %v555
  %v558 = vshrl.u32 %v540, %v556
  %v559 = vor.u32 %v557, %v558
  %v560 = vsub.s32 4294967266, %v555
  %v561 = vadd.s32 %v560, 127
  %v562 = vshll.u32 %v561, 23
  %v563 = vor.u32 4788187, %v562
  %v564 = vand.u32 2147483647, %v563
  %v566 = vcvt.s32.f32 %v559
  %v567 = vmul.f32 %v566, %v564
  %v568 = vxor.u32 %v567, 2147483648
  %v569 = vsel %vm486, %v568, %v567
  %v570 = vsub.s32 4, %v546
  %v571 = vsel %vm486, %v570, %v546
  %v572 = vsel %vm485, %v406, %v569
  %v573 = vsel %vm485, 0, %v571
  %v574 = vcosq.f32.pop %v572
  %v575 = vsinq.f32.pop %v572
  %vm576 = vweird.f32 %v406
  %v577 = vadd.s32 %v573, 3
  %v578 = vand.u32 %v577, 3
  %vm579 = vcmp.lt.s32.totalorder %v578, 2
  %vm580 = vcmp.eq.s32.totalorder %v578, 0
  %v581 = vxor.u32 %v575, 2147483648
  %v582 = vsel %vm580, %v574, %v581
  %vm583 = vcmp.eq.s32.totalorder %v578, 2
  %v584 = vxor.u32 %v574, 2147483648
  %v585 = vsel %vm583, %v584, %v575
  %v586 = vsel %vm579, %v582, %v585
  %v587 = vsel %vm576, nan, %v586
  %v588 = vtanh.pop %v406
  %v589 = vmul.f32 %v406, %v479
  %v590 = vadd.f32 %v479, 1e-08
  %v591 = vrcp.pop %v590
  %v592 = vmul.f32 %v406, %v591
  %vm593 = vcmp.eq.s32.totalorder %v330, 0
  %vm594 = vcmp.eq.s32.totalorder %v330, 1
  %vm595 = vcmp.eq.s32.totalorder %v330, 2
  %vm596 = vcmp.eq.s32.totalorder %v330, 3
  %vm597 = vcmp.eq.s32.totalorder %v330, 4
  %v598 = vsel %vm597, %v592, 0.0
  %v599 = vsel %vm596, %v589, %v598
  %v600 = vsel %vm595, %v588, %v599
  %v601 = vsel %vm594, %v587, %v600
  %v602 = vsel %vm593, %v483, %v601
  %v604 = vsel %vm331, %v602, 0
  %v607 = vsel %vm335, %v20, 0
  %609 = vmatprep.subr.mxu0 0.0
  %610 = vmatpush1.msra.mxu0 %v607
  %611 = vmatprep.subr.mxu0 0.0
  %612 = vmatpush1.msra.mxu0 0.0
  %613 = vmatprep.subr.mxu0 0.0
  %614 = vmatpush1.msra.mxu0 0.0
  %615 = vmatprep.subr.mxu0 0.0
  %616 = vmatpush1.msra.mxu0 0.0
  %617 = vmatprep.subr.mxu0 0.0
  %618 = vmatpush1.msra.mxu0 0.0
  %619 = vmatprep.subr.mxu0 0.0
  %620 = vmatpush1.msra.mxu0 0.0
  %621 = vmatprep.subr.mxu0 0.0
  %622 = vmatpush1.msra.mxu0 0.0
  %623 = vmatprep.subr.mxu0 0.0
  %624 = vmatpush1.msra.mxu0 0.0
  %625 = vmatprep.subr.mxu0 0.0
  %626 = vmatpush1.msra.mxu0 0.0
  %627 = vmatprep.subr.mxu0 0.0
  %628 = vmatpush1.msra.mxu0 0.0
  %629 = vmatprep.subr.mxu0 0.0
  %630 = vmatpush1.msra.mxu0 0.0
  %631 = vmatprep.subr.mxu0 0.0
  %632 = vmatpush1.msra.mxu0 0.0
  %633 = vmatprep.subr.mxu0 0.0
  %634 = vmatpush1.msra.mxu0 0.0
  %635 = vmatprep.subr.mxu0 0.0
  %636 = vmatpush1.msra.mxu0 0.0
  %637 = vmatprep.subr.mxu0 0.0
  %638 = vmatpush1.msra.mxu0 0.0
  %639 = vmatprep.subr.mxu0 0.0
  %640 = vmatpush1.msra.mxu0 0.0
  %641 = vmatprep.subr.mxu0 0.0
  %642 = vmatpush1.msra.mxu0 0.0
  %643 = vmatprep.subr.mxu0 0.0
  %644 = vmatpush1.msra.mxu0 0.0
  %645 = vmatprep.subr.mxu0 0.0
  %646 = vmatpush1.msra.mxu0 0.0
  %647 = vmatprep.subr.mxu0 0.0
  %648 = vmatpush1.msra.mxu0 0.0
  %649 = vmatprep.subr.mxu0 0.0
  %650 = vmatpush1.msra.mxu0 0.0
  %651 = vmatprep.subr.mxu0 0.0
  %652 = vmatpush1.msra.mxu0 0.0
  %653 = vmatprep.subr.mxu0 0.0
  %654 = vmatpush1.msra.mxu0 0.0
  %655 = vmatprep.subr.mxu0 0.0
  %656 = vmatpush1.msra.mxu0 0.0
  %657 = vmatprep.subr.mxu0 0.0
  %658 = vmatpush1.msra.mxu0 0.0
  %659 = vmatprep.subr.mxu0 0.0
  %660 = vmatpush1.msra.mxu0 0.0
  %661 = vmatprep.subr.mxu0 0.0
  %662 = vmatpush1.msra.mxu0 0.0
  %663 = vmatprep.subr.mxu0 0.0
  %664 = vmatpush1.msra.mxu0 0.0
  %665 = vmatprep.subr.mxu0 0.0
  %666 = vmatpush1.msra.mxu0 0.0
  %667 = vmatprep.subr.mxu0 0.0
  %668 = vmatpush1.msra.mxu0 0.0
  %669 = vmatprep.subr.mxu0 0.0
  %670 = vmatpush1.msra.mxu0 0.0
  %671 = vmatprep.subr.mxu0 0.0
  %672 = vmatpush1.msra.mxu0 0.0
  %673 = vmatprep.mubr.f32.mxu0 0.0
  %674 = vmatmul.mubr.f32.gmra.mrb[0].mxu0 %v604
  %v675 = vpop.f32.mrb[0].mxu0
  %v676 = vadd.f32 0.0, %v675
  %v677 = vpop.f32.mrb[0].mxu0
  %678 = vdwg.mxu0
  %v680 = vsel %vm254, %v19, 0
  %682 = vmatprep.subr.mxu0 0.0
  %683 = vmatpush1.msra.mxu0 %v18
  %684 = vmatprep.subr.mxu0 0.0
  %685 = vmatpush1.msra.mxu0 %v680
  %686 = vmatprep.subr.mxu0 0.0
  %687 = vmatpush1.msra.mxu0 0.0
  %688 = vmatprep.subr.mxu0 0.0
  %689 = vmatpush1.msra.mxu0 0.0
  %690 = vmatprep.subr.mxu0 0.0
  %691 = vmatpush1.msra.mxu0 0.0
  %692 = vmatprep.subr.mxu0 0.0
  %693 = vmatpush1.msra.mxu0 0.0
  %694 = vmatprep.subr.mxu0 0.0
  %695 = vmatpush1.msra.mxu0 0.0
  %696 = vmatprep.subr.mxu0 0.0
  %697 = vmatpush1.msra.mxu0 0.0
  %698 = vmatprep.subr.mxu0 0.0
  %699 = vmatpush1.msra.mxu0 0.0
  %700 = vmatprep.subr.mxu0 0.0
  %701 = vmatpush1.msra.mxu0 0.0
  %702 = vmatprep.subr.mxu0 0.0
  %703 = vmatpush1.msra.mxu0 0.0
  %704 = vmatprep.subr.mxu0 0.0
  %705 = vmatpush1.msra.mxu0 0.0
  %706 = vmatprep.subr.mxu0 0.0
  %707 = vmatpush1.msra.mxu0 0.0
  %708 = vmatprep.subr.mxu0 0.0
  %709 = vmatpush1.msra.mxu0 0.0
  %710 = vmatprep.subr.mxu0 0.0
  %711 = vmatpush1.msra.mxu0 0.0
  %712 = vmatprep.subr.mxu0 0.0
  %713 = vmatpush1.msra.mxu0 0.0
  %714 = vmatprep.subr.mxu0 0.0
  %715 = vmatpush1.msra.mxu0 0.0
  %716 = vmatprep.subr.mxu0 0.0
  %717 = vmatpush1.msra.mxu0 0.0
  %718 = vmatprep.subr.mxu0 0.0
  %719 = vmatpush1.msra.mxu0 0.0
  %720 = vmatprep.subr.mxu0 0.0
  %721 = vmatpush1.msra.mxu0 0.0
  %722 = vmatprep.subr.mxu0 0.0
  %723 = vmatpush1.msra.mxu0 0.0
  %724 = vmatprep.subr.mxu0 0.0
  %725 = vmatpush1.msra.mxu0 0.0
  %726 = vmatprep.subr.mxu0 0.0
  %727 = vmatpush1.msra.mxu0 0.0
  %728 = vmatprep.subr.mxu0 0.0
  %729 = vmatpush1.msra.mxu0 0.0
  %730 = vmatprep.subr.mxu0 0.0
  %731 = vmatpush1.msra.mxu0 0.0
  %732 = vmatprep.subr.mxu0 0.0
  %733 = vmatpush1.msra.mxu0 0.0
  %734 = vmatprep.subr.mxu0 0.0
  %735 = vmatpush1.msra.mxu0 0.0
  %736 = vmatprep.subr.mxu0 0.0
  %737 = vmatpush1.msra.mxu0 0.0
  %738 = vmatprep.subr.mxu0 0.0
  %739 = vmatpush1.msra.mxu0 0.0
  %740 = vmatprep.subr.mxu0 0.0
  %741 = vmatpush1.msra.mxu0 0.0
  %742 = vmatprep.subr.mxu0 0.0
  %743 = vmatpush1.msra.mxu0 0.0
  %744 = vmatprep.subr.mxu0 0.0
  %745 = vmatpush1.msra.mxu0 0.0
  %746 = vmatprep.mubr.f32.mxu0 0.0
  %747 = vmatmul.mubr.f32.gmra.mrb[0].mxu0 %v252
  %v748 = vpop.f32.mrb[0].mxu0
  %v749 = vadd.f32 %v676, %v748
  %v750 = vpop.f32.mrb[0].mxu0
  %751 = vdwg.mxu0
  %v752 = vlaneseq
  %v753 = vshrl.u32 %v752, 7
  %v754 = vsub.s32 0, %v753
  %v755 = vrot.slane %v29, %v754
  %v756 = vadd.f32 %v749, %v755
  %v757 = vmax.f32 %v756, 0.0
  %v759 = vsel %vm331, %v757, 0
  %761 = vmatprep.subr.mxu0 0.0
  %762 = vmatpush1.msra.mxu0 %v337
  %763 = vmatprep.subr.mxu0 0.0
  %764 = vmatpush1.msra.mxu0 0.0
  %765 = vmatprep.subr.mxu0 0.0
  %766 = vmatpush1.msra.mxu0 0.0
  %767 = vmatprep.subr.mxu0 0.0
  %768 = vmatpush1.msra.mxu0 0.0
  %769 = vmatprep.subr.mxu0 0.0
  %770 = vmatpush1.msra.mxu0 0.0
  %771 = vmatprep.subr.mxu0 0.0
  %772 = vmatpush1.msra.mxu0 0.0
  %773 = vmatprep.subr.mxu0 0.0
  %774 = vmatpush1.msra.mxu0 0.0
  %775 = vmatprep.subr.mxu0 0.0
  %776 = vmatpush1.msra.mxu0 0.0
  %777 = vmatprep.subr.mxu0 0.0
  %778 = vmatpush1.msra.mxu0 0.0
  %779 = vmatprep.subr.mxu0 0.0
  %780 = vmatpush1.msra.mxu0 0.0
  %781 = vmatprep.subr.mxu0 0.0
  %782 = vmatpush1.msra.mxu0 0.0
  %783 = vmatprep.subr.mxu0 0.0
  %784 = vmatpush1.msra.mxu0 0.0
  %785 = vmatprep.subr.mxu0 0.0
  %786 = vmatpush1.msra.mxu0 0.0
  %787 = vmatprep.subr.mxu0 0.0
  %788 = vmatpush1.msra.mxu0 0.0
  %789 = vmatprep.subr.mxu0 0.0
  %790 = vmatpush1.msra.mxu0 0.0
  %791 = vmatprep.subr.mxu0 0.0
  %792 = vmatpush1.msra.mxu0 0.0
  %793 = vmatprep.subr.mxu0 0.0
  %794 = vmatpush1.msra.mxu0 0.0
  %795 = vmatprep.subr.mxu0 0.0
  %796 = vmatpush1.msra.mxu0 0.0
  %797 = vmatprep.subr.mxu0 0.0
  %798 = vmatpush1.msra.mxu0 0.0
  %799 = vmatprep.subr.mxu0 0.0
  %800 = vmatpush1.msra.mxu0 0.0
  %801 = vmatprep.subr.mxu0 0.0
  %802 = vmatpush1.msra.mxu0 0.0
  %803 = vmatprep.subr.mxu0 0.0
  %804 = vmatpush1.msra.mxu0 0.0
  %805 = vmatprep.subr.mxu0 0.0
  %806 = vmatpush1.msra.mxu0 0.0
  %807 = vmatprep.subr.mxu0 0.0
  %808 = vmatpush1.msra.mxu0 0.0
  %809 = vmatprep.subr.mxu0 0.0
  %810 = vmatpush1.msra.mxu0 0.0
  %811 = vmatprep.subr.mxu0 0.0
  %812 = vmatpush1.msra.mxu0 0.0
  %813 = vmatprep.subr.mxu0 0.0
  %814 = vmatpush1.msra.mxu0 0.0
  %815 = vmatprep.subr.mxu0 0.0
  %816 = vmatpush1.msra.mxu0 0.0
  %817 = vmatprep.subr.mxu0 0.0
  %818 = vmatpush1.msra.mxu0 0.0
  %819 = vmatprep.subr.mxu0 0.0
  %820 = vmatpush1.msra.mxu0 0.0
  %821 = vmatprep.subr.mxu0 0.0
  %822 = vmatpush1.msra.mxu0 0.0
  %823 = vmatprep.subr.mxu0 0.0
  %824 = vmatpush1.msra.mxu0 0.0
  %825 = vmatprep.mubr.f32.mxu0 0.0
  %826 = vmatmul.mubr.f32.gmra.mrb[0].mxu0 %v759
  %v827 = vpop.f32.mrb[0].mxu0
  %v828 = vadd.f32 0.0, %v827
  %v829 = vpop.f32.mrb[0].mxu0
  %830 = vdwg.mxu0
  %831 = vmatprep.subr.mxu0 0.0
  %832 = vmatpush1.msra.mxu0 %v410
  %833 = vmatprep.subr.mxu0 0.0
  %834 = vmatpush1.msra.mxu0 0.0
  %835 = vmatprep.subr.mxu0 0.0
  %836 = vmatpush1.msra.mxu0 0.0
  %837 = vmatprep.subr.mxu0 0.0
  %838 = vmatpush1.msra.mxu0 0.0
  %839 = vmatprep.subr.mxu0 0.0
  %840 = vmatpush1.msra.mxu0 0.0
  %841 = vmatprep.subr.mxu0 0.0
  %842 = vmatpush1.msra.mxu0 0.0
  %843 = vmatprep.subr.mxu0 0.0
  %844 = vmatpush1.msra.mxu0 0.0
  %845 = vmatprep.subr.mxu0 0.0
  %846 = vmatpush1.msra.mxu0 0.0
  %847 = vmatprep.subr.mxu0 0.0
  %848 = vmatpush1.msra.mxu0 0.0
  %849 = vmatprep.subr.mxu0 0.0
  %850 = vmatpush1.msra.mxu0 0.0
  %851 = vmatprep.subr.mxu0 0.0
  %852 = vmatpush1.msra.mxu0 0.0
  %853 = vmatprep.subr.mxu0 0.0
  %854 = vmatpush1.msra.mxu0 0.0
  %855 = vmatprep.subr.mxu0 0.0
  %856 = vmatpush1.msra.mxu0 0.0
  %857 = vmatprep.subr.mxu0 0.0
  %858 = vmatpush1.msra.mxu0 0.0
  %859 = vmatprep.subr.mxu0 0.0
  %860 = vmatpush1.msra.mxu0 0.0
  %861 = vmatprep.subr.mxu0 0.0
  %862 = vmatpush1.msra.mxu0 0.0
  %863 = vmatprep.subr.mxu0 0.0
  %864 = vmatpush1.msra.mxu0 0.0
  %865 = vmatprep.subr.mxu0 0.0
  %866 = vmatpush1.msra.mxu0 0.0
  %867 = vmatprep.subr.mxu0 0.0
  %868 = vmatpush1.msra.mxu0 0.0
  %869 = vmatprep.subr.mxu0 0.0
  %870 = vmatpush1.msra.mxu0 0.0
  %871 = vmatprep.subr.mxu0 0.0
  %872 = vmatpush1.msra.mxu0 0.0
  %873 = vmatprep.subr.mxu0 0.0
  %874 = vmatpush1.msra.mxu0 0.0
  %875 = vmatprep.subr.mxu0 0.0
  %876 = vmatpush1.msra.mxu0 0.0
  %877 = vmatprep.subr.mxu0 0.0
  %878 = vmatpush1.msra.mxu0 0.0
  %879 = vmatprep.subr.mxu0 0.0
  %880 = vmatpush1.msra.mxu0 0.0
  %881 = vmatprep.subr.mxu0 0.0
  %882 = vmatpush1.msra.mxu0 0.0
  %883 = vmatprep.subr.mxu0 0.0
  %884 = vmatpush1.msra.mxu0 0.0
  %885 = vmatprep.subr.mxu0 0.0
  %886 = vmatpush1.msra.mxu0 0.0
  %887 = vmatprep.subr.mxu0 0.0
  %888 = vmatpush1.msra.mxu0 0.0
  %889 = vmatprep.subr.mxu0 0.0
  %890 = vmatpush1.msra.mxu0 0.0
  %891 = vmatprep.subr.mxu0 0.0
  %892 = vmatpush1.msra.mxu0 0.0
  %893 = vmatprep.subr.mxu0 0.0
  %894 = vmatpush1.msra.mxu0 0.0
  %895 = vmatprep.mubr.f32.mxu0 0.0
  %896 = vmatmul.mubr.f32.gmra.mrb[0].mxu0 %v759
  %v897 = vpop.f32.mrb[0].mxu0
  %v898 = vadd.f32 0.0, %v897
  %v899 = vpop.f32.mrb[0].mxu0
  %900 = vdwg.mxu0
  %v901 = vmul.f32 %v828, %v828
  %v902 = vmul.f32 %v901, %v828
  %v903 = vand.u32 2147483647, %v828
  %vm904 = vcmp.le.f32.partialorder %v903, 0.7853982
  %vm905 = vcmp.lt.s32.totalorder %v828, 0
  %v906 = vand.u32 %v828, 2139095040
  %v907 = vshrl.u32 %v906, 23
  %v908 = vsub.s32 %v907, 127
  %v909 = vand.u32 2147483647, %v828
  %v910 = vand.u32 %v909, 8388607
  %v911 = vor.u32 %v910, 8388608
  %v912 = vsub.s32 0, %v911
  %v913 = vadd.s32 %v908, 1
  %vm914 = vcmp.gt.s32.totalorder %v913, 0
  %v915 = vsel %vm914, %v913, 0
  %v916 = vshrl.u32 %v915, 5
  %v917 = vand.u32 %v915, 31
  %v918 = vsub.s32 32, %v917
  %v919 = vshrl.u32 683565275, %v918
  %v920 = vshll.u32 683565275, %v917
  %v921 = vshrl.u32 2475754826, %v918
  %v922 = vor.u32 %v920, %v921
  %v923 = vshll.u32 2475754826, %v917
  %v924 = vshrl.u32 2131351028, %v918
  %v925 = vor.u32 %v923, %v924
  %v926 = vshll.u32 2131351028, %v917
  %v927 = vshrl.u32 2102212464, %v918
  %v928 = vor.u32 %v926, %v927
  %v929 = vshll.u32 2102212464, %v917
  %v930 = vshrl.u32 920167782, %v918
  %v931 = vor.u32 %v929, %v930
  %v932 = vshll.u32 920167782, %v917
  %v933 = vshrl.u32 1326507024, %v918
  %v934 = vor.u32 %v932, %v933
  %vm935 = vcmp.lt.s32.totalorder %v916, 1
  %vm936 = vcmp.lt.s32.totalorder %v916, 2
  %vm937 = vcmp.lt.s32.totalorder %v916, 3
  %vm938 = vcmp.lt.s32.totalorder %v916, 4
  %v939 = vsel %vm935, %v919, %v922
  %v940 = vsel %vm938, %v928, 2102212464
  %v941 = vsel %vm937, %v925, %v940
  %v942 = vsel %vm936, %v939, %v941
  %v943 = vsel %vm935, %v922, %v925
  %v944 = vsel %vm938, %v931, 920167782
  %v945 = vsel %vm937, %v928, %v944
  %v946 = vsel %vm936, %v943, %v945
  %v947 = vsel %vm935, %v925, %v928
  %v948 = vsel %vm938, %v934, 1326507024
  %v949 = vsel %vm937, %v931, %v948
  %v950 = vsel %vm936, %v947, %v949
  %v951 = vshll.u32 %v911, 8
  %v952 = vmul.u32.u64.compose %v951, %v950
  %v953 = vextract.low.u32 %v952
  %v954 = vextract.high.u32 %v952
  %v955 = vmul.u32.u64.compose %v951, %v946
  %v956 = vextract.low.u32 %v955
  %v957 = vextract.high.u32 %v955
  %v958 = vmul.u32 %v951, %v942
  %v959 = vadd.s32 %v954, %v956
  %vm960 = vc.u32 %v954, %v956
  %v961 = vadd.s32 %v957, 1
  %v962 = vsel %vm960, %v961, %v957
  %v963 = vadd.s32 %v958, %v962
  %v964 = vadd.s32 %v963, 536870912
  %v965 = vshrl.u32 %v964, 30
  %v966 = vshll.u32 %v965, 30
  %v967 = vsub.s32 %v963, %v966
  %vm968 = vcmp.lt.s32.totalorder %v967, 0
  %v969 = vsub.s32 0, %v967
  %v970 = vsel %vm968, %v969, %v967
  %v971 = vclz %v970
  %v972 = vsub.s32 %v971, 2
  %vm973 = vcmp.gt.s32.totalorder 0, %v972
  %v974 = vsel %vm973, 0, %v972
  %v975 = vsub.s32 32, %v974
  %v976 = vshll.u32 %v967, %v974
  %v977 = vshrl.u32 %v959, %v975
  %v978 = vor.u32 %v976, %v977
  %v979 = vsub.s32 4294967266, %v974
  %v980 = vadd.s32 %v979, 127
  %v981 = vshll.u32 %v980, 23
  %v982 = vor.u32 4788187, %v981
  %v983 = vand.u32 2147483647, %v982
  %v985 = vcvt.s32.f32 %v978
  %v986 = vmul.f32 %v985, %v983
  %v987 = vxor.u32 %v986, 2147483648
  %v988 = vsel %vm905, %v987, %v986
  %v989 = vsub.s32 4, %v965
  %v990 = vsel %vm905, %v989, %v965
  %v991 = vsel %vm904, %v828, %v988
  %v992 = vsel %vm904, 0, %v990
  %v993 = vcosq.f32.pop %v991
  %v994 = vsinq.f32.pop %v991
  %vm995 = vweird.f32 %v828
  %v996 = vadd.s32 %v992, 3
  %v997 = vand.u32 %v996, 3
  %vm998 = vcmp.lt.s32.totalorder %v997, 2
  %vm999 = vcmp.eq.s32.totalorder %v997, 0
  %v1000 = vxor.u32 %v994, 2147483648
  %v1001 = vsel %vm999, %v993, %v1000
  %vm1002 = vcmp.eq.s32.totalorder %v997, 2
  %v1003 = vxor.u32 %v993, 2147483648
  %v1004 = vsel %vm1002, %v1003, %v994
  %v1005 = vsel %vm998, %v1001, %v1004
  %v1006 = vsel %vm995, nan, %v1005
  %v1007 = vtanh.pop %v828
  %v1008 = vmul.f32 %v828, %v898
  %v1009 = vadd.f32 %v898, 1e-08
  %v1010 = vrcp.pop %v1009
  %v1011 = vmul.f32 %v828, %v1010
  %v1012 = vsel %vm597, %v1011, 0.0
  %v1013 = vsel %vm596, %v1008, %v1012
  %v1014 = vsel %vm595, %v1007, %v1013
  %v1015 = vsel %vm594, %v1006, %v1014
  %v1016 = vsel %vm593, %v902, %v1015
  %v1018 = vsel %vm335, %v23, 0
  %1020 = vmatprep.subr.mxu0 0.0
  %1021 = vmatpush1.msra.mxu0 %v1018
  %1022 = vmatprep.subr.mxu0 0.0
  %1023 = vmatpush1.msra.mxu0 0.0
  %1024 = vmatprep.subr.mxu0 0.0
  %1025 = vmatpush1.msra.mxu0 0.0
  %1026 = vmatprep.subr.mxu0 0.0
  %1027 = vmatpush1.msra.mxu0 0.0
  %1028 = vmatprep.subr.mxu0 0.0
  %1029 = vmatpush1.msra.mxu0 0.0
  %1030 = vmatprep.subr.mxu0 0.0
  %1031 = vmatpush1.msra.mxu0 0.0
  %1032 = vmatprep.subr.mxu0 0.0
  %1033 = vmatpush1.msra.mxu0 0.0
  %1034 = vmatprep.subr.mxu0 0.0
  %1035 = vmatpush1.msra.mxu0 0.0
  %1036 = vmatprep.subr.mxu0 0.0
  %1037 = vmatpush1.msra.mxu0 0.0
  %1038 = vmatprep.subr.mxu0 0.0
  %1039 = vmatpush1.msra.mxu0 0.0
  %1040 = vmatprep.subr.mxu0 0.0
  %1041 = vmatpush1.msra.mxu0 0.0
  %1042 = vmatprep.subr.mxu0 0.0
  %1043 = vmatpush1.msra.mxu0 0.0
  %1044 = vmatprep.subr.mxu0 0.0
  %1045 = vmatpush1.msra.mxu0 0.0
  %1046 = vmatprep.subr.mxu0 0.0
  %1047 = vmatpush1.msra.mxu0 0.0
  %1048 = vmatprep.subr.mxu0 0.0
  %1049 = vmatpush1.msra.mxu0 0.0
  %1050 = vmatprep.subr.mxu0 0.0
  %1051 = vmatpush1.msra.mxu0 0.0
  %1052 = vmatprep.subr.mxu0 0.0
  %1053 = vmatpush1.msra.mxu0 0.0
  %1054 = vmatprep.subr.mxu0 0.0
  %1055 = vmatpush1.msra.mxu0 0.0
  %1056 = vmatprep.subr.mxu0 0.0
  %1057 = vmatpush1.msra.mxu0 0.0
  %1058 = vmatprep.subr.mxu0 0.0
  %1059 = vmatpush1.msra.mxu0 0.0
  %1060 = vmatprep.subr.mxu0 0.0
  %1061 = vmatpush1.msra.mxu0 0.0
  %1062 = vmatprep.subr.mxu0 0.0
  %1063 = vmatpush1.msra.mxu0 0.0
  %1064 = vmatprep.subr.mxu0 0.0
  %1065 = vmatpush1.msra.mxu0 0.0
  %1066 = vmatprep.subr.mxu0 0.0
  %1067 = vmatpush1.msra.mxu0 0.0
  %1068 = vmatprep.subr.mxu0 0.0
  %1069 = vmatpush1.msra.mxu0 0.0
  %1070 = vmatprep.subr.mxu0 0.0
  %1071 = vmatpush1.msra.mxu0 0.0
  %1072 = vmatprep.subr.mxu0 0.0
  %1073 = vmatpush1.msra.mxu0 0.0
  %1074 = vmatprep.subr.mxu0 0.0
  %1075 = vmatpush1.msra.mxu0 0.0
  %1076 = vmatprep.subr.mxu0 0.0
  %1077 = vmatpush1.msra.mxu0 0.0
  %1078 = vmatprep.subr.mxu0 0.0
  %1079 = vmatpush1.msra.mxu0 0.0
  %1080 = vmatprep.subr.mxu0 0.0
  %1081 = vmatpush1.msra.mxu0 0.0
  %1082 = vmatprep.subr.mxu0 0.0
  %1083 = vmatpush1.msra.mxu0 0.0
  %1084 = vmatprep.mubr.f32.mxu0 0.0
  %1085 = vmatmul.mubr.f32.gmra.mrb[0].mxu0 %v604
  %v1086 = vpop.f32.mrb[0].mxu0
  %v1087 = vadd.f32 0.0, %v1086
  %v1088 = vpop.f32.mrb[0].mxu0
  %1089 = vdwg.mxu0
  %v1091 = vsel %vm254, %v22, 0
  %1093 = vmatprep.subr.mxu0 0.0
  %1094 = vmatpush1.msra.mxu0 %v21
  %1095 = vmatprep.subr.mxu0 0.0
  %1096 = vmatpush1.msra.mxu0 %v1091
  %1097 = vmatprep.subr.mxu0 0.0
  %1098 = vmatpush1.msra.mxu0 0.0
  %1099 = vmatprep.subr.mxu0 0.0
  %1100 = vmatpush1.msra.mxu0 0.0
  %1101 = vmatprep.subr.mxu0 0.0
  %1102 = vmatpush1.msra.mxu0 0.0
  %1103 = vmatprep.subr.mxu0 0.0
  %1104 = vmatpush1.msra.mxu0 0.0
  %1105 = vmatprep.subr.mxu0 0.0
  %1106 = vmatpush1.msra.mxu0 0.0
  %1107 = vmatprep.subr.mxu0 0.0
  %1108 = vmatpush1.msra.mxu0 0.0
  %1109 = vmatprep.subr.mxu0 0.0
  %1110 = vmatpush1.msra.mxu0 0.0
  %1111 = vmatprep.subr.mxu0 0.0
  %1112 = vmatpush1.msra.mxu0 0.0
  %1113 = vmatprep.subr.mxu0 0.0
  %1114 = vmatpush1.msra.mxu0 0.0
  %1115 = vmatprep.subr.mxu0 0.0
  %1116 = vmatpush1.msra.mxu0 0.0
  %1117 = vmatprep.subr.mxu0 0.0
  %1118 = vmatpush1.msra.mxu0 0.0
  %1119 = vmatprep.subr.mxu0 0.0
  %1120 = vmatpush1.msra.mxu0 0.0
  %1121 = vmatprep.subr.mxu0 0.0
  %1122 = vmatpush1.msra.mxu0 0.0
  %1123 = vmatprep.subr.mxu0 0.0
  %1124 = vmatpush1.msra.mxu0 0.0
  %1125 = vmatprep.subr.mxu0 0.0
  %1126 = vmatpush1.msra.mxu0 0.0
  %1127 = vmatprep.subr.mxu0 0.0
  %1128 = vmatpush1.msra.mxu0 0.0
  %1129 = vmatprep.subr.mxu0 0.0
  %1130 = vmatpush1.msra.mxu0 0.0
  %1131 = vmatprep.subr.mxu0 0.0
  %1132 = vmatpush1.msra.mxu0 0.0
  %1133 = vmatprep.subr.mxu0 0.0
  %1134 = vmatpush1.msra.mxu0 0.0
  %1135 = vmatprep.subr.mxu0 0.0
  %1136 = vmatpush1.msra.mxu0 0.0
  %1137 = vmatprep.subr.mxu0 0.0
  %1138 = vmatpush1.msra.mxu0 0.0
  %1139 = vmatprep.subr.mxu0 0.0
  %1140 = vmatpush1.msra.mxu0 0.0
  %1141 = vmatprep.subr.mxu0 0.0
  %1142 = vmatpush1.msra.mxu0 0.0
  %1143 = vmatprep.subr.mxu0 0.0
  %1144 = vmatpush1.msra.mxu0 0.0
  %1145 = vmatprep.subr.mxu0 0.0
  %1146 = vmatpush1.msra.mxu0 0.0
  %1147 = vmatprep.subr.mxu0 0.0
  %1148 = vmatpush1.msra.mxu0 0.0
  %1149 = vmatprep.subr.mxu0 0.0
  %1150 = vmatpush1.msra.mxu0 0.0
  %1151 = vmatprep.subr.mxu0 0.0
  %1152 = vmatpush1.msra.mxu0 0.0
  %1153 = vmatprep.subr.mxu0 0.0
  %1154 = vmatpush1.msra.mxu0 0.0
  %1155 = vmatprep.subr.mxu0 0.0
  %1156 = vmatpush1.msra.mxu0 0.0
  %1157 = vmatprep.mubr.f32.mxu0 0.0
  %1158 = vmatmul.mubr.f32.gmra.mrb[0].mxu0 %v252
  %v1159 = vpop.f32.mrb[0].mxu0
  %v1160 = vadd.f32 %v1087, %v1159
  %v1161 = vpop.f32.mrb[0].mxu0
  %1162 = vdwg.mxu0
  %v1164 = vsel %vm331, %v1016, 0
  %v1167 = vsel %vm335, %v24, 0
  %1169 = vmatprep.subr.mxu0 0.0
  %1170 = vmatpush1.msra.mxu0 %v1167
  %1171 = vmatprep.subr.mxu0 0.0
  %1172 = vmatpush1.msra.mxu0 0.0
  %1173 = vmatprep.subr.mxu0 0.0
  %1174 = vmatpush1.msra.mxu0 0.0
  %1175 = vmatprep.subr.mxu0 0.0
  %1176 = vmatpush1.msra.mxu0 0.0
  %1177 = vmatprep.subr.mxu0 0.0
  %1178 = vmatpush1.msra.mxu0 0.0
  %1179 = vmatprep.subr.mxu0 0.0
  %1180 = vmatpush1.msra.mxu0 0.0
  %1181 = vmatprep.subr.mxu0 0.0
  %1182 = vmatpush1.msra.mxu0 0.0
  %1183 = vmatprep.subr.mxu0 0.0
  %1184 = vmatpush1.msra.mxu0 0.0
  %1185 = vmatprep.subr.mxu0 0.0
  %1186 = vmatpush1.msra.mxu0 0.0
  %1187 = vmatprep.subr.mxu0 0.0
  %1188 = vmatpush1.msra.mxu0 0.0
  %1189 = vmatprep.subr.mxu0 0.0
  %1190 = vmatpush1.msra.mxu0 0.0
  %1191 = vmatprep.subr.mxu0 0.0
  %1192 = vmatpush1.msra.mxu0 0.0
  %1193 = vmatprep.subr.mxu0 0.0
  %1194 = vmatpush1.msra.mxu0 0.0
  %1195 = vmatprep.subr.mxu0 0.0
  %1196 = vmatpush1.msra.mxu0 0.0
  %1197 = vmatprep.subr.mxu0 0.0
  %1198 = vmatpush1.msra.mxu0 0.0
  %1199 = vmatprep.subr.mxu0 0.0
  %1200 = vmatpush1.msra.mxu0 0.0
  %1201 = vmatprep.subr.mxu0 0.0
  %1202 = vmatpush1.msra.mxu0 0.0
  %1203 = vmatprep.subr.mxu0 0.0
  %1204 = vmatpush1.msra.mxu0 0.0
  %1205 = vmatprep.subr.mxu0 0.0
  %1206 = vmatpush1.msra.mxu0 0.0
  %1207 = vmatprep.subr.mxu0 0.0
  %1208 = vmatpush1.msra.mxu0 0.0
  %1209 = vmatprep.subr.mxu0 0.0
  %1210 = vmatpush1.msra.mxu0 0.0
  %1211 = vmatprep.subr.mxu0 0.0
  %1212 = vmatpush1.msra.mxu0 0.0
  %1213 = vmatprep.subr.mxu0 0.0
  %1214 = vmatpush1.msra.mxu0 0.0
  %1215 = vmatprep.subr.mxu0 0.0
  %1216 = vmatpush1.msra.mxu0 0.0
  %1217 = vmatprep.subr.mxu0 0.0
  %1218 = vmatpush1.msra.mxu0 0.0
  %1219 = vmatprep.subr.mxu0 0.0
  %1220 = vmatpush1.msra.mxu0 0.0
  %1221 = vmatprep.subr.mxu0 0.0
  %1222 = vmatpush1.msra.mxu0 0.0
  %1223 = vmatprep.subr.mxu0 0.0
  %1224 = vmatpush1.msra.mxu0 0.0
  %1225 = vmatprep.subr.mxu0 0.0
  %1226 = vmatpush1.msra.mxu0 0.0
  %1227 = vmatprep.subr.mxu0 0.0
  %1228 = vmatpush1.msra.mxu0 0.0
  %1229 = vmatprep.subr.mxu0 0.0
  %1230 = vmatpush1.msra.mxu0 0.0
  %1231 = vmatprep.subr.mxu0 0.0
  %1232 = vmatpush1.msra.mxu0 0.0
  %1233 = vmatprep.mubr.f32.mxu0 0.0
  %1234 = vmatmul.mubr.f32.gmra.mrb[0].mxu0 %v1164
  %v1235 = vpop.f32.mrb[0].mxu0
  %v1236 = vadd.f32 0.0, %v1235
  %v1237 = vpop.f32.mrb[0].mxu0
  %1238 = vdwg.mxu0
  %v1239 = vadd.f32 %v1160, %v1236
  %v1240 = vlaneseq
  %v1241 = vshrl.u32 %v1240, 7
  %v1242 = vsub.s32 0, %v1241
  %v1243 = vrot.slane %v30, %v1242
  %v1244 = vadd.f32 %v1239, %v1243
  %vm1245 = vcmask 3072
  %1246 = vst.msk [vmem:[%s3] sm:$0xf] %vm1245, %v1244
  // Predicated region
  $region14: #{tpu_custom_call.1} parent=0 // pred_check
    _
  $region15: #{tpu_custom_call.1} parent=0 // pred_check_branch
    %1248 = sbr.rel (0) target = $region17
  $region16: #{tpu_custom_call.1} parent=0 // pred_region
    _
  $region17: #{tpu_custom_call.1} parent=0 // pred_fallthru
    _
  // Predicated region
  $region18: #{tpu_custom_call.1} parent=0 // pred_check
    _
  $region19: #{tpu_custom_call.1} parent=0 // pred_check_branch
    %1250 = sbr.rel (0) target = $region21
  $region20: #{tpu_custom_call.1} parent=0 // pred_region
    _
  $region21: #{tpu_custom_call.1} parent=0 // pred_fallthru
    _

</llo_original>
